<compile_context>
chip_gen: v7x
topology: tpu7x:2x2x1
jax: 0.10.0
libtpu: 0.0.40
codegen_flags: <defaults>
</compile_context>

<pallas_src>
import functools

import jax
import jax.numpy as jnp
from jax.experimental import pallas as pl
from jax.experimental.pallas import tpu as pltpu

LANES = 128
SUBLANES = 8
MAX_CHUNK_ROWS = 512          # in-kernel streaming fold granularity


def _cdiv(a, b):
    return -(-a // b)


def _pick_chunk_rows(tile_rows):
    """Largest divisor of tile_rows that is <= 512 and a multiple of 8."""
    if tile_rows <= MAX_CHUNK_ROWS:
        return tile_rows
    for c in range(MAX_CHUNK_ROWS, SUBLANES - 1, -SUBLANES):
        if tile_rows % c == 0:
            return c
    return SUBLANES


def _sumsq_kernel(yhat_ref, y_ref, out_ref, *, tile_rows, chunk_rows,
                  tiles_per_chunk, valid_rows, need_mask):
    """Accumulate this chunk's sum((yhat - y)^2) into its (8, 128) out block."""
    i = pl.program_id(1)                       # reduction step within the chunk

    @pl.when(i == 0)
    def _init():
        out_ref[...] = jnp.zeros_like(out_ref)

    n_sub = tile_rows // chunk_rows            # static

    def fold(masked, row_base):
        def one(g, acc):
            r0 = g * chunk_rows
            if not isinstance(r0, int):
                r0 = pl.multiple_of(r0, chunk_rows)
            d = (yhat_ref[pl.ds(r0, chunk_rows), :].astype(jnp.float32)
                 - y_ref[pl.ds(r0, chunk_rows), :].astype(jnp.float32))
            sq = d * d
            if masked:
                # Zero rows past the end of the array (ragged last tile and the
                # clamped duplicate tile on the 2-chunk v7x path).
                row = (jax.lax.broadcasted_iota(jnp.int32, (chunk_rows, LANES), 0)
                       + row_base + r0)
                sq = jnp.where(row < valid_rows, sq, 0.0)
            # Pure VALU fold down to one vreg; no cross-lane XLU reduce in the hot loop.
            return acc + sq.reshape(chunk_rows // SUBLANES, SUBLANES, LANES).sum(axis=0)

        zero = jnp.zeros((SUBLANES, LANES), jnp.float32)
        if n_sub == 1:
            out_ref[...] += one(0, zero)
        else:
            out_ref[...] += jax.lax.fori_loop(0, n_sub, one, zero,
                                              unroll=(n_sub <= 16))

    if need_mask:
        c = pl.program_id(0)
        t = c * tiles_per_chunk + i            # global UNCLAMPED tile index
        row_base = t * tile_rows
        tile_end = row_base + tile_rows

        @pl.when(tile_end <= valid_rows)       # fully in-bounds: no mask cost
        def _bulk():
            fold(False, row_base)

        @pl.when(tile_end > valid_rows)        # last ragged / duplicate tile only
        def _edge():
            fold(True, row_base)
    else:
        fold(False, 0)


def rmse_loss(yhat, y, eps=1e-6):
    """RMSE loss: sqrt(mean((yhat - y)^2) + eps). Returns a scalar f32."""
    assert yhat.shape == y.shape, "yhat and y must have the same shape"
    n_elems = yhat.size
    assert n_elems > 0

    yhat_f = jnp.ravel(yhat)                   # native dtype, no astype here
    y_f = jnp.ravel(y)

    def _quantum(dt):
        # sublane quantum safe for the (g, 8, 128) fold at any dtype width
        return max(SUBLANES, 32 // max(1, dt.itemsize))

    quantum = max(_quantum(yhat.dtype), _quantum(y.dtype))
    itemsize = max(yhat.dtype.itemsize, y.dtype.itemsize)

    rows_total = n_elems // LANES
    rows_bulk = (rows_total // quantum) * quantum      # kernel-handled rows
    bulk_elems = rows_bulk * LANES
    tail_elems = n_elems - bulk_elems                  # < quantum*128 + 128, tiny

    total = jnp.float32(0.0)

    if rows_bulk > 0:
        # --- per-generation tile sizing -------------------------------------
        kind = ""
        try:
            dev = jax.devices()[0]
            if dev.platform == "tpu":
                kind = dev.device_kind.lower()
        except Exception:
            kind = ""
        is_v7 = "v7" in kind
        big_vmem = is_v7 or ("v6" in kind)             # 32 MiB scoped default
        tile_bytes = (4 << 20) if big_vmem else (2 << 20)

        max_tile_rows = tile_bytes // (LANES * itemsize)
        max_tile_rows = max(MAX_CHUNK_ROWS, (max_tile_rows // MAX_CHUNK_ROWS)
                            * MAX_CHUNK_ROWS)

        tile_rows = rows_bulk if rows_bulk <= max_tile_rows else max_tile_rows
        chunk_rows = _pick_chunk_rows(tile_rows)

        num_tiles = _cdiv(rows_bulk, tile_rows)
        # 2-way "parallel" split only where there are 2 TensorCores (v7x).
        num_chunks = min(2, num_tiles) if is_v7 else 1
        tiles_per_chunk = _cdiv(num_tiles, num_chunks)
        # Mask needed iff the grid covers more rows than the bulk actually has.
        need_mask = (num_chunks * tiles_per_chunk * tile_rows) != rows_bulk

        yhat_bulk = (yhat_f if bulk_elems == n_elems
                     else yhat_f[:bulk_elems]).reshape(rows_bulk, LANES)
        y_bulk = (y_f if bulk_elems == n_elems
                  else y_f[:bulk_elems]).reshape(rows_bulk, LANES)

        def in_map(c, i):
            t = jnp.minimum(c * tiles_per_chunk + i, num_tiles - 1)
            return (t, 0)

        kernel = functools.partial(
            _sumsq_kernel,
            tile_rows=tile_rows,
            chunk_rows=chunk_rows,
            tiles_per_chunk=tiles_per_chunk,
            valid_rows=rows_bulk,
            need_mask=need_mask,
        )

        cost = pl.CostEstimate(
            flops=3 * bulk_elems,
            transcendentals=0,
            bytes_accessed=bulk_elems * (yhat.dtype.itemsize + y.dtype.itemsize)
            + num_chunks * SUBLANES * LANES * 4,
        )

        partials = pl.pallas_call(
            kernel,
            out_shape=jax.ShapeDtypeStruct((num_chunks * SUBLANES, LANES),
                                           jnp.float32),
            grid_spec=pltpu.PrefetchScalarGridSpec(
                num_scalar_prefetch=0,
                grid=(num_chunks, tiles_per_chunk),
                in_specs=[
                    pl.BlockSpec((tile_rows, LANES), in_map),
                    pl.BlockSpec((tile_rows, LANES), in_map),
                ],
                out_specs=pl.BlockSpec((SUBLANES, LANES), lambda c, i: (c, 0)),
            ),
            compiler_params=pltpu.CompilerParams(
                dimension_semantics=("parallel", "arbitrary"),
            ),
            cost_estimate=cost,
        )(yhat_bulk, y_bulk)

        # Tiny epilogue: one cross-lane reduce over (num_chunks*8, 128).
        total = total + jnp.sum(partials)

    if tail_elems > 0:
        # Sub-quantum / sub-lane tail handled outside the kernel (no pad pass).
        ty = yhat_f[bulk_elems:].astype(jnp.float32)
        tt = y_f[bulk_elems:].astype(jnp.float32)
        total = total + jnp.sum((ty - tt) ** 2)

    mse = total / jnp.float32(n_elems)
    return jnp.sqrt(mse + jnp.float32(eps))


if __name__ == "__main__":
    key = jax.random.PRNGKey(0)
    k1, k2, k3, k4 = jax.random.split(key, 4)

    # Primary check: small regression-style output (batch=2, channels=4, 16x16).
    yhat = jax.random.normal(k1, (2, 4, 16, 16), dtype=jnp.float32)
    y = jax.random.normal(k2, (2, 4, 16, 16), dtype=jnp.float32)
    loss = jax.block_until_ready(rmse_loss(yhat, y, eps=1e-6))
    ref = jnp.sqrt(jnp.mean((yhat - y) ** 2) + 1e-6)
    assert jnp.allclose(loss, ref, rtol=1e-5, atol=1e-6), (loss, ref)

    # Secondary check: exercises the non-128-aligned path (bulk kernel + jnp tail,
    # multi-sub-chunk in-kernel fold).
    yhat2 = jax.random.normal(k3, (2, 4, 130, 130), dtype=jnp.float32)
    y2 = jax.random.normal(k4, (2, 4, 130, 130), dtype=jnp.float32)
    loss2 = jax.block_until_ready(rmse_loss(yhat2, y2, eps=1e-6))
    ref2 = jnp.sqrt(jnp.mean((yhat2 - y2) ** 2) + 1e-6)
    assert jnp.allclose(loss2, ref2, rtol=1e-5, atol=1e-6), (loss2, ref2)

    print("KERNEL_OK")
</pallas_src>

<mosaic_0001>
module attributes {stable_mosaic.version = 11 : i64} {
  func.func @_sumsq_kernel(%arg0: i32, %arg1: i32, %arg2: memref<16x128xf32, #tpu.memory_space<vmem>>, %arg3: memref<16x128xf32, #tpu.memory_space<vmem>>, %arg4: memref<8x128xf32, #tpu.memory_space<vmem>>) attributes {dimension_semantics = [#tpu.dimension_semantics<parallel>, #tpu.dimension_semantics<arbitrary>], iteration_bounds = array<i64: 1, 1>, scalar_prefetch = 0 : i64, scratch_operands = 0 : i64, tpu.core_type = #tpu.core_type<tc>, window_params = [{transform_indices = @transform_0, window_bounds = array<i64: 16, 128>}, {transform_indices = @transform_1, window_bounds = array<i64: 16, 128>}, {transform_indices = @transform_2, window_bounds = array<i64: 8, 128>}]} {
    %c0_i32 = arith.constant 0 : i32
    %0 = arith.cmpi eq, %arg1, %c0_i32 : i32
    %1 = arith.extui %0 : i1 to i32
    %c0_i32_0 = arith.constant 0 : i32
    %2 = arith.cmpi ne, %1, %c0_i32_0 : i32
    scf.if %2 {
      %cst_9 = arith.constant 0.000000e+00 : f32
      %14 = vector.broadcast %cst_9 : f32 to vector<8x128xf32>
      %c0_10 = arith.constant 0 : index
      %c0_11 = arith.constant 0 : index
      %15 = vector.load %arg4[%c0_10, %c0_11] : memref<8x128xf32, #tpu.memory_space<vmem>>, vector<8x128xf32>
      tpu.vector_store %arg4[%c0_10, %c0_11], %14 {strides = array<i32>} : memref<8x128xf32, #tpu.memory_space<vmem>>, vector<8x128xf32>,
    } else {
    }
    %cst = arith.constant 0.000000e+00 : f32
    %3 = vector.broadcast %cst : f32 to vector<8x128xf32>
    %c0 = arith.constant 0 : index
    %c0_1 = arith.constant 0 : index
    %4 = vector.load %arg4[%c0, %c0_1] : memref<8x128xf32, #tpu.memory_space<vmem>>, vector<8x128xf32>
    %c0_2 = arith.constant 0 : index
    %c0_3 = arith.constant 0 : index
    %5 = vector.load %arg2[%c0_2, %c0_3] : memref<16x128xf32, #tpu.memory_space<vmem>>, vector<16x128xf32>
    %c0_4 = arith.constant 0 : index
    %c0_5 = arith.constant 0 : index
    %6 = vector.load %arg3[%c0_4, %c0_5] : memref<16x128xf32, #tpu.memory_space<vmem>>, vector<16x128xf32>
    %7 = arith.subf %5, %6 : vector<16x128xf32>
    %8 = arith.mulf %7, %7 : vector<16x128xf32>
    %9 = vector.shape_cast %8 : vector<16x128xf32> to vector<2x8x128xf32>
    %cst_6 = arith.constant dense<0.000000e+00> : vector<8x128xf32>
    %10 = vector.multi_reduction <add>, %9, %cst_6 [0] : vector<2x8x128xf32> to vector<8x128xf32>
    %11 = arith.addf %3, %10 : vector<8x128xf32>
    %12 = arith.addf %4, %11 : vector<8x128xf32>
    %c0_7 = arith.constant 0 : index
    %c0_8 = arith.constant 0 : index
    %13 = vector.load %arg4[%c0_7, %c0_8] : memref<8x128xf32, #tpu.memory_space<vmem>>, vector<8x128xf32>
    tpu.vector_store %arg4[%c0_7, %c0_8], %12 {strides = array<i32>} : memref<8x128xf32, #tpu.memory_space<vmem>>, vector<8x128xf32>,
    return
  }
  func.func @transform_0(%arg0: i32, %arg1: i32) -> (i32, i32) {
    %c1_i32 = arith.constant 1 : i32
    %0 = arith.muli %arg0, %c1_i32 : i32
    %1 = arith.addi %0, %arg1 : i32
    %c0_i32 = arith.constant 0 : i32
    %2 = arith.minsi %1, %c0_i32 : i32
    %c0_i32_0 = arith.constant 0 : i32
    %c0_i32_1 = arith.constant 0 : i32
    return %2, %c0_i32_0 : i32, i32
  }
  func.func @transform_1(%arg0: i32, %arg1: i32) -> (i32, i32) {
    %c1_i32 = arith.constant 1 : i32
    %0 = arith.muli %arg0, %c1_i32 : i32
    %1 = arith.addi %0, %arg1 : i32
    %c0_i32 = arith.constant 0 : i32
    %2 = arith.minsi %1, %c0_i32 : i32
    %c0_i32_0 = arith.constant 0 : i32
    %c0_i32_1 = arith.constant 0 : i32
    return %2, %c0_i32_0 : i32, i32
  }
  func.func @transform_2(%arg0: i32, %arg1: i32) -> (i32, i32) {
    %c0_i32 = arith.constant 0 : i32
    %c0_i32_0 = arith.constant 0 : i32
    return %arg0, %c0_i32 : i32, i32
  }
}

</mosaic_0001>

<llo_original>
// kernel: tpu_custom_call.1
$region0: #{tpu_custom_call.1}
  #allocation0 [shape = 'u32[]', space=smem, size = 0x4, offset = 0x4, fixed_abs, tag = 'smem constant byte address 0x4 - core index']
  #allocation1 [shape = 'u32[144,128]{1,0:T(1,128)}', space=vmem, size = 0x12000, scoped, tag = 'internal scratch']
  %s0 = inlined_call_operand.hbm [shape: f32[16,128], index: 0, kind: input, shape index: {}]
  %s1 = inlined_call_operand.hbm [shape: f32[16,128], index: 1, kind: input, shape index: {}]
  %s2 = inlined_call_operand.hbm [shape: f32[8,128], index: 2, kind: output, shape index: {}]
  %s3 = sld [smem:[#allocation0]]
  $region30: #{tpu_custom_call.1} parent=0
    _
  %s5 = ssub.s32 1, %s3
  %s6 = scalar_select 0, %s5, %s3
  $region1: #{tpu_custom_call.1} parent=0
    #allocation2 [shape = 'u8[8192]{0}', space=vmem, size = 0x2000, scoped, tag = 'input window, operand 0, single buffered']
    #allocation3 [shape = 's32[1]{0}', space=sflag, size = 0x4, scoped, tag = 'scoped memory for tpu_custom_call.1']
    #allocation4 [shape = 's32[1]{0}', space=sflag, size = 0x4, scoped, tag = 'scoped memory for tpu_custom_call.1']
    #allocation5 [shape = 'u8[8192]{0}', space=vmem, size = 0x2000, scoped, tag = 'input window, operand 1, single buffered']
    #allocation6 [shape = 's32[1]{0}', space=sflag, size = 0x4, scoped, tag = 'scoped memory for tpu_custom_call.1']
    #allocation7 [shape = 'u8[4096]{0}', space=vmem, size = 0x1000, scoped, tag = 'output window, operand 0, single buffered']
    %7 = vsyncpa [#allocation3], 0
    %8 = vsyncpa [#allocation6], 0
    %9 = vsyncpa [#allocation4], 0
    // Predicated region
    $region2: #{tpu_custom_call.1} parent=1 // pred_check
      _
    $region3: #{tpu_custom_call.1} parent=1 // pred_check_branch
      %11 = sbr.rel (0) target = $region5
    $region4: #{tpu_custom_call.1} parent=1 // pred_region
      %s12 = sadd.s32 0, 0
      %p13 = scmp.lt.s32.totalorder %s12, 0
      %s14 = scalar_select %p13, %s12, 0
      %s15 = smul.u32 2, %s14
      %s17 = ssub.s32 256, 256
      %18 = vsyncadd [#allocation3], %s17
      %s19 = smul.addr %s15, 128
      %s20 = scalar_lea.hbm %s0, %s19
      %s21 = sshll.u32 [#allocation2], 4
      %s22 = int_to_ptr.vmem [resolvable:$true] %s21
      %27 = dma.hbm_to_vmem [thread:$0]  %s20, 256, %s22, [#allocation3], 128, 128, 8
    $region5: #{tpu_custom_call.1} parent=1 // pred_fallthru
      _
    // Predicated region
    $region6: #{tpu_custom_call.1} parent=1 // pred_check
      _
    $region7: #{tpu_custom_call.1} parent=1 // pred_check_branch
      %29 = sbr.rel (0) target = $region9
    $region8: #{tpu_custom_call.1} parent=1 // pred_region
      %s30 = sadd.s32 0, 0
      %p31 = scmp.lt.s32.totalorder %s30, 0
      %s32 = scalar_select %p31, %s30, 0
      %s33 = smul.u32 2, %s32
      %s35 = ssub.s32 256, 256
      %36 = vsyncadd [#allocation6], %s35
      %s37 = smul.addr %s33, 128
      %s38 = scalar_lea.hbm %s1, %s37
      %s39 = sshll.u32 [#allocation5], 4
      %s40 = int_to_ptr.vmem [resolvable:$true] %s39
      %45 = dma.hbm_to_vmem [thread:$0]  %s38, 256, %s40, [#allocation6], 128, 128, 8
    $region9: #{tpu_custom_call.1} parent=1 // pred_fallthru
      _
    // Predicated region
    $region10: #{tpu_custom_call.1} parent=1 // pred_check
      _
    $region11: #{tpu_custom_call.1} parent=1 // pred_check_branch
      %47 = sbr.rel (0) target = $region13
    $region12: #{tpu_custom_call.1} parent=1 // pred_region
      %48 = dma.done [#allocation3], 256
    $region13: #{tpu_custom_call.1} parent=1 // pred_fallthru
      _
    // Predicated region
    $region14: #{tpu_custom_call.1} parent=1 // pred_check
      _
    $region15: #{tpu_custom_call.1} parent=1 // pred_check_branch
      %50 = sbr.rel (0) target = $region17
    $region16: #{tpu_custom_call.1} parent=1 // pred_region
      %51 = dma.done [#allocation6], 256
    $region17: #{tpu_custom_call.1} parent=1 // pred_fallthru
      _
    %s52 = sadd.s32 0, 0
    %p53 = scmp.lt.s32.totalorder %s52, 0
    %s54 = scalar_select %p53, %s52, 0
    %s55 = smul.u32 2, %s54
    %s56 = sadd.s32 0, 0
    %p57 = scmp.lt.s32.totalorder %s56, 0
    %s58 = scalar_select %p57, %s56, 0
    %s59 = smul.u32 2, %s58
    %p60 = scmp.eq.s32.totalorder 0, 0
    // Predicated region
    $region18: #{tpu_custom_call.1} parent=1 // pred_check
      %p61 = pneg %p60
    $region19: #{tpu_custom_call.1} parent=1 // pred_check_branch
      %63 = sbr.rel (%p61) target = $region21
    $region20: #{tpu_custom_call.1} parent=1 // pred_region
      %64 = vst [vmem:[#allocation7] sm:$0xff] 0.0
    $region21: #{tpu_custom_call.1} parent=1 // pred_fallthru
      _
    %v65 = vld [vmem:[#allocation7] sm:$0xff]
    %v66 = vld [vmem:[#allocation2] sm:$0xff]
    %v67 = vld [vmem:[#allocation2 + $0x8] sm:$0xff]
    %v68 = vld [vmem:[#allocation5] sm:$0xff]
    %v69 = vld [vmem:[#allocation5 + $0x8] sm:$0xff]
    %v70 = vsub.f32 %v66, %v68
    %v71 = vsub.f32 %v67, %v69
    %v72 = vmul.f32 %v70, %v70
    %v73 = vmul.f32 %v71, %v71
    %v74 = vadd.f32 %v72, %v73
    %v75 = vadd.f32 %v74, 0.0
    %v76 = vadd.f32 %v65, %v75
    %77 = vst [vmem:[#allocation7] sm:$0xff] %v76
    // Predicated region
    $region22: #{tpu_custom_call.1} parent=1 // pred_check
      _
    $region23: #{tpu_custom_call.1} parent=1 // pred_check_branch
      %79 = sbr.rel (0) target = $region25
    $region24: #{tpu_custom_call.1} parent=1 // pred_region
      %s81 = ssub.s32 128, 128
      %82 = vsyncadd [#allocation4], %s81
      %s84 = sshll.u32 [#allocation7], 4
      %s85 = int_to_ptr.vmem [resolvable:$true] %s84
      %87 = dma.vmem_to_hbm [thread:$0]  %s85, 128, %s2, [#allocation4]
    $region25: #{tpu_custom_call.1} parent=1 // pred_fallthru
      _
    // Predicated region
    $region26: #{tpu_custom_call.1} parent=1 // pred_check
      _
    $region27: #{tpu_custom_call.1} parent=1 // pred_check_branch
      %89 = sbr.rel (0) target = $region29
    $region28: #{tpu_custom_call.1} parent=1 // pred_region
      %90 = dma.done [#allocation4], 128
    $region29: #{tpu_custom_call.1} parent=1 // pred_fallthru
      _
    %91 = vsyncpa [#allocation3], 1
    %92 = vsyncpa [#allocation6], 1
    %93 = vsyncpa [#allocation4], 1

</llo_original>
